<compile_context>
chip_gen: v5e
topology: v5e:2x2
jax: 0.10.0
libtpu: 0.0.40
codegen_flags: <defaults>
</compile_context>

<pallas_src>
import functools

import jax
import jax.numpy as jnp
import numpy as np
from jax.experimental import pallas as pl
from jax.experimental.pallas import tpu as pltpu


def _policy_mlp_kernel(obs_ref, w1t_ref, w2t_ref, out_ref, *, action_dim):
    """One batch tile: out = softmax(relu(obs @ W1T) @ W2T_padded, axis=1).

    obs_ref : [TB, obs_dim]      (compute dtype)
    w1t_ref : [obs_dim, hidden]  (compute dtype, pre-transposed)
    w2t_ref : [hidden, A_pad]    (compute dtype, pre-transposed, action axis
                                  zero-padded to a multiple of 128)
    out_ref : [TB, A_pad]        (f32, lane-dense store)
    """
    # Hidden layer: relu(obs @ W1^T) on the MXU, f32 accumulation.
    h = jnp.dot(obs_ref[...], w1t_ref[...], preferred_element_type=jnp.float32)
    h = jnp.maximum(h, 0.0)

    # Output logits: h @ W2^T (cast h back to the MXU compute dtype; no-op for f32).
    logits = jnp.dot(h.astype(w2t_ref.dtype), w2t_ref[...],
                     preferred_element_type=jnp.float32)

    # Mask the zero-padded action columns so they get zero probability.
    a_pad = logits.shape[1]
    if action_dim < a_pad:
        col = jax.lax.broadcasted_iota(jnp.int32, logits.shape, 1)
        logits = jnp.where(col < action_dim, logits, jnp.float32(-1e30))

    # Numerically-stable softmax over the action axis (axis=1), all in f32.
    m = jnp.max(logits, axis=1, keepdims=True)
    e = jnp.exp(logits - m)
    denom = jnp.sum(e, axis=1, keepdims=True)
    inv = pl.reciprocal(denom, approx=True)  # EUP slot instead of VALU divide
    out_ref[...] = (e * inv).astype(out_ref.dtype)


def prepare_params(w1, w2, compute_dtype=jnp.float32):
    """One-time parameter preparation (hoisted out of the per-step forward).

    w1: [hidden, obs_dim], w2: [action_dim, hidden]  (nn.Linear [out, in] layout)
    Returns (w1t, w2t_padded, action_dim) where:
      w1t        : [obs_dim, hidden]
      w2t_padded : [hidden, A_pad]  with A_pad = round_up(action_dim, 128)
    Use compute_dtype=jnp.bfloat16 on v6e/v7x for large problems (accumulation
    and the softmax stay f32 inside the kernel).
    """
    action_dim = w2.shape[0]
    a_pad = ((action_dim + 127) // 128) * 128
    w1t = jnp.asarray(w1).T.astype(compute_dtype)                    # [obs_dim, hidden]
    w2t = jnp.asarray(w2).T                                          # [hidden, action_dim]
    w2t = jnp.pad(w2t, ((0, 0), (0, a_pad - action_dim))).astype(compute_dtype)
    return w1t, w2t, action_dim


def policy_mlp_forward(obs, params, *, tile_b=256):
    """obs: [batch, obs_dim]; params from prepare_params. Returns [batch, action_dim] f32."""
    w1t, w2t, action_dim = params
    batch, obs_dim = obs.shape
    hidden = w1t.shape[1]
    a_pad = w2t.shape[1]

    if obs.dtype != w1t.dtype:
        obs = obs.astype(w1t.dtype)

    kernel = functools.partial(_policy_mlp_kernel, action_dim=action_dim)

    if batch <= tile_b:
        # Small batch: no grid, no pipeline machinery. Everything is a single
        # VMEM-resident block; avoids the ~0.35us per-grid-step overhead that
        # dominated the previous grid=(1,) version.
        out = pl.pallas_call(
            kernel,
            out_shape=jax.ShapeDtypeStruct((batch, a_pad), jnp.float32),
            in_specs=[
                pl.BlockSpec(memory_space=pltpu.MemorySpace.VMEM),
                pl.BlockSpec(memory_space=pltpu.MemorySpace.VMEM),
                pl.BlockSpec(memory_space=pltpu.MemorySpace.VMEM),
            ],
            out_specs=pl.BlockSpec(memory_space=pltpu.MemorySpace.VMEM),
        )(obs, w1t, w2t)
        return out[:, :action_dim]

    # Large batch: tile the batch axis only. Weights map to block (0, 0) on
    # every step (fetched once, VMEM-resident), obs/out tiles are auto
    # double-buffered, and the batch axis is "parallel" for v7x megacore.
    b_pad = ((batch + tile_b - 1) // tile_b) * tile_b
    if b_pad != batch:
        obs = jnp.pad(obs, ((0, b_pad - batch), (0, 0)))
    out = pl.pallas_call(
        kernel,
        out_shape=jax.ShapeDtypeStruct((b_pad, a_pad), jnp.float32),
        grid=(b_pad // tile_b,),
        in_specs=[
            pl.BlockSpec((tile_b, obs_dim), lambda i: (i, 0)),
            pl.BlockSpec((obs_dim, hidden), lambda i: (0, 0)),
            pl.BlockSpec((hidden, a_pad), lambda i: (0, 0)),
        ],
        out_specs=pl.BlockSpec((tile_b, a_pad), lambda i: (i, 0)),
        compiler_params=pltpu.CompilerParams(
            dimension_semantics=("parallel",),
        ),
    )(obs, w1t, w2t)
    return out[:batch, :action_dim]


def xavier_normal(key, out_features, in_features):
    # Matches nn.init.xavier_normal_: std = sqrt(2 / (fan_in + fan_out))
    std = np.sqrt(2.0 / (in_features + out_features))
    return std * jax.random.normal(key, (out_features, in_features), dtype=jnp.float32)


def _reference(obs, w1, w2):
    h = jnp.maximum(obs @ w1.T, 0.0)
    return jax.nn.softmax(h @ w2.T, axis=1)


if __name__ == "__main__":
    # Small shapes consistent with the MLP: batch=2, obs_dim=16, hidden=32, actions=4
    batch, obs_dim, hidden, action_dim = 2, 16, 32, 4

    key = jax.random.PRNGKey(0)
    k_obs, k_w1, k_w2, k_big = jax.random.split(key, 4)

    obs = jax.random.normal(k_obs, (batch, obs_dim), dtype=jnp.float32)
    w1 = xavier_normal(k_w1, hidden, obs_dim)      # l1.weight: [hidden, obs_dim]
    w2 = xavier_normal(k_w2, action_dim, hidden)   # l2.weight: [action_dim, hidden]

    # One-time parameter prep (transpose + lane padding hoisted out of forward).
    params = prepare_params(w1, w2, compute_dtype=jnp.float32)

    # --- Small-batch (no-grid) path ---
    out = policy_mlp_forward(obs, params)
    out = jax.block_until_ready(out)

    ref = _reference(obs, w1, w2)
    # Tolerance relaxed to 1e-3 because of the approximate (EUP) reciprocal.
    np.testing.assert_allclose(np.asarray(out), np.asarray(ref), rtol=1e-3, atol=1e-3)
    np.testing.assert_allclose(np.asarray(out).sum(axis=1), np.ones(batch),
                               rtol=1e-3, atol=1e-3)

    # --- Batch-tiled path (exercises grid, resident weights, batch padding) ---
    big_batch = 600  # non-multiple of tile_b to exercise the padding/slice logic
    obs_big = jax.random.normal(k_big, (big_batch, obs_dim), dtype=jnp.float32)
    out_big = jax.block_until_ready(policy_mlp_forward(obs_big, params, tile_b=256))
    ref_big = _reference(obs_big, w1, w2)
    np.testing.assert_allclose(np.asarray(out_big), np.asarray(ref_big),
                               rtol=1e-3, atol=1e-3)
    np.testing.assert_allclose(np.asarray(out_big).sum(axis=1), np.ones(big_batch),
                               rtol=1e-3, atol=1e-3)

    print("KERNEL_OK")
</pallas_src>

<mosaic_0001>
module attributes {stable_mosaic.version = 11 : i64} {
  func.func @_policy_mlp_kernel(%arg0: memref<2x16xf32, #tpu.memory_space<vmem>>, %arg1: memref<16x32xf32, #tpu.memory_space<vmem>>, %arg2: memref<32x128xf32, #tpu.memory_space<vmem>>, %arg3: memref<2x128xf32, #tpu.memory_space<vmem>>) attributes {dimension_semantics = [], scalar_prefetch = 0 : i64, scratch_operands = 0 : i64, tpu.core_type = #tpu.core_type<tc>} {
    %c0 = arith.constant 0 : index
    %c0_0 = arith.constant 0 : index
    %0 = vector.load %arg0[%c0, %c0_0] : memref<2x16xf32, #tpu.memory_space<vmem>>, vector<2x16xf32>
    %c0_1 = arith.constant 0 : index
    %c0_2 = arith.constant 0 : index
    %1 = vector.load %arg1[%c0_1, %c0_2] : memref<16x32xf32, #tpu.memory_space<vmem>>, vector<16x32xf32>
    %cst = arith.constant dense<0.000000e+00> : vector<2x32xf32>
    %2 = tpu.matmul %0, %1, %cst {dimension_numbers = #tpu.dot_dimension_numbers<[1], [0], [0], [1], [0, 0, 1, 1], [], []>} : vector<2x16xf32>, vector<16x32xf32>, vector<2x32xf32> -> vector<2x32xf32>
    %cst_3 = arith.constant 0.000000e+00 : f32
    %3 = vector.broadcast %cst_3 : f32 to vector<2x32xf32>
    %4 = arith.maximumf %2, %3 : vector<2x32xf32>
    %c0_4 = arith.constant 0 : index
    %c0_5 = arith.constant 0 : index
    %5 = vector.load %arg2[%c0_4, %c0_5] : memref<32x128xf32, #tpu.memory_space<vmem>>, vector<32x128xf32>
    %cst_6 = arith.constant dense<0.000000e+00> : vector<2x128xf32>
    %6 = tpu.matmul %4, %5, %cst_6 {dimension_numbers = #tpu.dot_dimension_numbers<[1], [0], [0], [1], [0, 0, 1, 1], [], []>} : vector<2x32xf32>, vector<32x128xf32>, vector<2x128xf32> -> vector<2x128xf32>
    %7 = tpu.iota {dimensions = array<i32: 1>} : vector<2x128xi32>
    %c4_i32 = arith.constant 4 : i32
    %8 = vector.broadcast %c4_i32 : i32 to vector<2x128xi32>
    %9 = arith.cmpi slt, %7, %8 : vector<2x128xi32>
    %cst_7 = arith.constant -1.000000e+30 : f32
    %10 = vector.broadcast %cst_7 : f32 to vector<2x128xf32>
    %11 = arith.select %9, %6, %10 : vector<2x128xi1>, vector<2x128xf32>
    %cst_8 = arith.constant dense<0xFF800000> : vector<2xf32>
    %12 = vector.multi_reduction <maximumf>, %11, %cst_8 [1] : vector<2x128xf32> to vector<2xf32>
    %13 = vector.shape_cast %12 : vector<2xf32> to vector<2x1xf32>
    %14 = vector.broadcast %13 : vector<2x1xf32> to vector<2x128xf32>
    %15 = arith.subf %11, %14 : vector<2x128xf32>
    %16 = math.exp %15 : vector<2x128xf32>
    %cst_9 = arith.constant dense<0.000000e+00> : vector<2xf32>
    %17 = vector.multi_reduction <add>, %16, %cst_9 [1] : vector<2x128xf32> to vector<2xf32>
    %18 = vector.shape_cast %17 : vector<2xf32> to vector<2x1xf32>
    %19 = tpu.reciprocal %18 {approx = true} : vector<2x1xf32> -> vector<2x1xf32>
    %20 = vector.broadcast %19 : vector<2x1xf32> to vector<2x128xf32>
    %21 = arith.mulf %16, %20 : vector<2x128xf32>
    %c0_10 = arith.constant 0 : index
    %c0_11 = arith.constant 0 : index
    %22 = vector.load %arg3[%c0_10, %c0_11] : memref<2x128xf32, #tpu.memory_space<vmem>>, vector<2x128xf32>
    tpu.vector_store %arg3[%c0_10, %c0_11], %21 {strides = array<i32>} : memref<2x128xf32, #tpu.memory_space<vmem>>, vector<2x128xf32>,
    return
  }
}

</mosaic_0001>

<llo_original>
// kernel: tpu_custom_call.1
$region0: #{tpu_custom_call.1}
  #allocation0 [shape = 'u32[]', space=smem, size = 0x4, offset = 0x4, fixed_abs, tag = 'smem constant byte address 0x4 - core index']
  #allocation1 [shape = 'u32[72,128]{1,0:T(1,128)}', space=vmem, size = 0x9000, scoped, tag = 'internal scratch']
  %s0 = inlined_call_operand.hbm [shape: f32[2,16], index: 0, kind: input, shape index: {}]
  %s1 = inlined_call_operand.hbm [shape: f32[16,32], index: 1, kind: input, shape index: {}]
  %s2 = inlined_call_operand.hbm [shape: f32[32,128], index: 2, kind: input, shape index: {}]
  %s3 = inlined_call_operand.hbm [shape: f32[2,128], index: 3, kind: output, shape index: {}]
  %s4 = sld [smem:[#allocation0]]
  $region34: #{tpu_custom_call.1} parent=0
    _
  %s6 = ssub.s32 1, %s4
  %s7 = scalar_select 0, %s6, %s4
  $region1: #{tpu_custom_call.1} parent=0
    #allocation2 [shape = 'u8[1024]{0}', space=vmem, size = 0x400, scoped, tag = 'input window, operand 0, single buffered']
    #allocation3 [shape = 's32[1]{0}', space=sflag, size = 0x4, scoped, tag = 'scoped memory for tpu_custom_call.1']
    #allocation4 [shape = 's32[1]{0}', space=sflag, size = 0x4, scoped, tag = 'scoped memory for tpu_custom_call.1']
    #allocation5 [shape = 'u8[8192]{0}', space=vmem, size = 0x2000, scoped, tag = 'input window, operand 1, single buffered']
    #allocation6 [shape = 's32[1]{0}', space=sflag, size = 0x4, scoped, tag = 'scoped memory for tpu_custom_call.1']
    #allocation7 [shape = 'u8[16384]{0}', space=vmem, size = 0x4000, scoped, tag = 'input window, operand 2, single buffered']
    #allocation8 [shape = 'u8[1024]{0}', space=vmem, size = 0x400, scoped, tag = 'output window, operand 0, single buffered']
    %8 = vsyncpa [#allocation3], 0
    %9 = vsyncpa [#allocation6], 0
    %10 = vsyncpa [#allocation4], 0
    // Predicated region
    $region2: #{tpu_custom_call.1} parent=1 // pred_check
      _
    $region3: #{tpu_custom_call.1} parent=1 // pred_check_branch
      %12 = sbr.rel (0) target = $region5
    $region4: #{tpu_custom_call.1} parent=1 // pred_region
      %14 = vsyncadd [#allocation3], 0
      %s16 = sshll.u32 %s0, 4
      %s17 = int_to_ptr.hbm [resolvable:$true] %s16
      %s18 = sshll.u32 [#allocation2], 4
      %s19 = int_to_ptr.vmem [resolvable:$true] %s18
      %21 = dma.hbm_to_vmem [thread:$0]  %s17, 32, %s19, [#allocation3]
    $region5: #{tpu_custom_call.1} parent=1 // pred_fallthru
      _
    // Predicated region
    $region6: #{tpu_custom_call.1} parent=1 // pred_check
      _
    $region7: #{tpu_custom_call.1} parent=1 // pred_check_branch
      %23 = sbr.rel (0) target = $region9
    $region8: #{tpu_custom_call.1} parent=1 // pred_region
      %25 = vsyncadd [#allocation6], 0
      %s26 = sshll.u32 %s1, 4
      %s27 = int_to_ptr.hbm [resolvable:$true] %s26
      %s28 = sshll.u32 [#allocation5], 4
      %s29 = int_to_ptr.vmem [resolvable:$true] %s28
      %34 = dma.hbm_to_vmem [thread:$0]  %s27, 256, %s29, [#allocation6], 128, 128, 8
    $region9: #{tpu_custom_call.1} parent=1 // pred_fallthru
      _
    // Predicated region
    $region10: #{tpu_custom_call.1} parent=1 // pred_check
      _
    $region11: #{tpu_custom_call.1} parent=1 // pred_check_branch
      %36 = sbr.rel (0) target = $region13
    $region12: #{tpu_custom_call.1} parent=1 // pred_region
      %38 = vsyncadd [#allocation6], 0
      %s39 = sshll.u32 %s2, 4
      %s40 = int_to_ptr.hbm [resolvable:$true] %s39
      %s41 = sshll.u32 [#allocation7], 4
      %s42 = int_to_ptr.vmem [resolvable:$true] %s41
      %47 = dma.hbm_to_vmem [thread:$0]  %s40, 512, %s42, [#allocation6], 128, 128, 8
    $region13: #{tpu_custom_call.1} parent=1 // pred_fallthru
      _
    // Predicated region
    $region14: #{tpu_custom_call.1} parent=1 // pred_check
      _
    $region15: #{tpu_custom_call.1} parent=1 // pred_check_branch
      %49 = sbr.rel (0) target = $region17
    $region16: #{tpu_custom_call.1} parent=1 // pred_region
      %51 = dma.done [#allocation3], 32
    $region17: #{tpu_custom_call.1} parent=1 // pred_fallthru
      _
    // Predicated region
    $region18: #{tpu_custom_call.1} parent=1 // pred_check
      _
    $region19: #{tpu_custom_call.1} parent=1 // pred_check_branch
      %53 = sbr.rel (0) target = $region21
    $region20: #{tpu_custom_call.1} parent=1 // pred_region
      %55 = dma.done [#allocation6], 256
    $region21: #{tpu_custom_call.1} parent=1 // pred_fallthru
      _
    // Predicated region
    $region22: #{tpu_custom_call.1} parent=1 // pred_check
      _
    $region23: #{tpu_custom_call.1} parent=1 // pred_check_branch
      %57 = sbr.rel (0) target = $region25
    $region24: #{tpu_custom_call.1} parent=1 // pred_region
      %59 = dma.done [#allocation6], 512
    $region25: #{tpu_custom_call.1} parent=1 // pred_fallthru
      _
    %v60 = vld [vmem:[#allocation2] sm:$0x3]
    %v61 = vld [vmem:[#allocation5] sm:$0xff]
    %v62 = vld [vmem:[#allocation5 + $0x8] sm:$0xff]
    %vm63 = vcmask 130048
    %v65 = vsel %vm63, %v60, 0
    %67 = vmatpush.msra.mxu0 0.0
    %68 = vmatpush.msra.mxu0 0.0
    %69 = vmatpush.msra.mxu0 0.0
    %70 = vmatpush.msra.mxu0 0.0
    %71 = vmatpush.msra.mxu0 0.0
    %72 = vmatpush.msra.mxu0 0.0
    %73 = vmatpush.msra.mxu0 0.0
    %74 = vmatpush.msra.mxu0 0.0
    %75 = vmatpush.msra.mxu0 0.0
    %76 = vmatpush.msra.mxu0 0.0
    %77 = vmatpush.msra.mxu0 0.0
    %78 = vmatpush.msra.mxu0 0.0
    %79 = vmatpush.msra.mxu0 0.0
    %80 = vmatpush.msra.mxu0 0.0
    %81 = vmatpush.msra.mxu0 %v62
    %82 = vmatpush.msra.mxu0 %v61
    %83 = vmatmul.f32.gmra.mxu0 %v65
    %v84 = vpop.f32.mrf.mxu0
    %v85 = vadd.f32 0.0, %v84
    %86 = vdwg.mxu0
    %v87 = vmax.f32 %v85, 0.0
    %v88 = vld [vmem:[#allocation7] sm:$0xff]
    %v89 = vld [vmem:[#allocation7 + $0x8] sm:$0xff]
    %v90 = vld [vmem:[#allocation7 + $0x10] sm:$0xff]
    %v91 = vld [vmem:[#allocation7 + $0x18] sm:$0xff]
    %vm92 = vcmask 261120
    %v94 = vsel %vm92, %v87, 0
    %96 = vmatpush.msra.mxu0 0.0
    %97 = vmatpush.msra.mxu0 0.0
    %98 = vmatpush.msra.mxu0 0.0
    %99 = vmatpush.msra.mxu0 0.0
    %100 = vmatpush.msra.mxu0 0.0
    %101 = vmatpush.msra.mxu0 0.0
    %102 = vmatpush.msra.mxu0 0.0
    %103 = vmatpush.msra.mxu0 0.0
    %104 = vmatpush.msra.mxu0 0.0
    %105 = vmatpush.msra.mxu0 0.0
    %106 = vmatpush.msra.mxu0 0.0
    %107 = vmatpush.msra.mxu0 0.0
    %108 = vmatpush.msra.mxu0 %v91
    %109 = vmatpush.msra.mxu0 %v90
    %110 = vmatpush.msra.mxu0 %v89
    %111 = vmatpush.msra.mxu0 %v88
    %112 = vmatmul.f32.gmra.mxu0 %v94
    %v113 = vpop.f32.mrf.mxu0
    %v114 = vadd.f32 0.0, %v113
    %115 = vdwg.mxu0
    %v116 = vlaneseq
    %v117 = vand.u32 %v116, 127
    %vm118 = vcmp.lt.s32.totalorder %v117, 4
    %v119 = vsel %vm118, %v114, -1e+30
    %vm120 = vcmask 1041408
    %v121 = vsel %vm120, %v119, -inf
    %122 = vmax.xlane.f32.xlu0 %v121
    %v123 = vpop.xlane.xlu0 %122
    %v124 = vsub.f32 %v119, %v123
    %v125 = vmul.f32 %v124, 1.442695
    %v126 = vpow.pop %v125
    %v127 = vsel %vm120, %v126, 0.0
    %128 = vadd.xlane.f32.xlu0 %v127
    %v129 = vpop.xlane.xlu0 %128
    %v130 = vrcp.pop %v129
    %v131 = vmul.f32 %v126, %v130
    %132 = vst [vmem:[#allocation8] sm:$0x3] %v131
    // Predicated region
    $region26: #{tpu_custom_call.1} parent=1 // pred_check
      _
    $region27: #{tpu_custom_call.1} parent=1 // pred_check_branch
      %134 = sbr.rel (0) target = $region29
    $region28: #{tpu_custom_call.1} parent=1 // pred_region
      %136 = vsyncadd [#allocation4], 0
      %s138 = sshll.u32 [#allocation8], 4
      %s139 = int_to_ptr.vmem [resolvable:$true] %s138
      %s140 = sshll.u32 %s3, 4
      %s141 = int_to_ptr.hbm [resolvable:$true] %s140
      %143 = dma.vmem_to_hbm [thread:$0]  %s139, 32, %s141, [#allocation4]
    $region29: #{tpu_custom_call.1} parent=1 // pred_fallthru
      _
    // Predicated region
    $region30: #{tpu_custom_call.1} parent=1 // pred_check
      _
    $region31: #{tpu_custom_call.1} parent=1 // pred_check_branch
      %145 = sbr.rel (0) target = $region33
    $region32: #{tpu_custom_call.1} parent=1 // pred_region
      %147 = dma.done [#allocation4], 32
    $region33: #{tpu_custom_call.1} parent=1 // pred_fallthru
      _
    %148 = vsyncpa [#allocation3], 1
    %149 = vsyncpa [#allocation6], 1
    %150 = vsyncpa [#allocation4], 1

</llo_original>
